<compile_context>
chip_gen: v5e
topology: v5e:2x2
jax: 0.10.0
libtpu: 0.0.40
codegen_flags: <defaults>
</compile_context>

<pallas_src>
import functools

import jax
import jax.numpy as jnp
from jax.experimental import pallas as pl
from jax.experimental.pallas import tpu as pltpu

_LANE = 128
_MIB = 1024 * 1024


# ---------------------------------------------------------------------------
# VMEM policy (generation-aware)
# ---------------------------------------------------------------------------
def _tpu_vmem_capacity_bytes():
    """Physical VMEM per TensorCore; conservative (v7x-sized) fallback."""
    try:
        info = pltpu.get_tpu_info()
        cap = getattr(info, "vmem_capacity_bytes", None)
        if cap:
            return int(cap)
    except Exception:
        pass
    return 64 * _MIB


def _vmem_policy():
    cap = _tpu_vmem_capacity_bytes()
    if cap >= 100 * _MIB:
        # v5e / v6e: 128 MiB physical VMEM.
        return dict(budget=72 * _MIB, limit_cap=96 * _MIB, headroom=2.0,
                    big_vmem=True)
    # v7x: 64 MiB physical -> leave room for Mosaic internal scratch.
    return dict(budget=24 * _MIB, limit_cap=40 * _MIB, headroom=1.3,
                big_vmem=False)


# ---------------------------------------------------------------------------
# Fused single-pass kernel: GAP -> MLP -> rescale, one (Bt, C, HW) block/step.
# ---------------------------------------------------------------------------
def _attn_cnal_fused_kernel(x_ref, w1_ref, b1_ref, w2_ref, b2_ref, o_ref, *, inv_hw):
    # Global average pool over the (possibly non-128-aligned) spatial lane
    # axis, accumulated in f32. Mosaic masks the ragged lane tail.
    gap = jnp.sum(x_ref[...], axis=-1, dtype=jnp.float32) * inv_hw        # (Bt, C)

    # fc1 + ReLU   (w1 pre-transposed to (C, C4))
    h = jnp.dot(gap, w1_ref[...], preferred_element_type=jnp.float32) + b1_ref[...]
    h = jnp.maximum(h, 0.0)                                               # (Bt, C4)

    # fc2 + Sigmoid (w2 pre-transposed to (C4, C))
    s = jnp.dot(h, w2_ref[...], preferred_element_type=jnp.float32) + b2_ref[...]
    s = jax.nn.sigmoid(s)                                                 # (Bt, C)

    # Per-channel rescale in the input dtype (no full-block f32 cast).
    s_cast = s.astype(o_ref.dtype)
    o_ref[...] = x_ref[...] * s_cast[:, :, None]


# ---------------------------------------------------------------------------
# Split-path rescale kernel: stream x in lane-dense (1, C, HWt) tiles and
# multiply by the precomputed per-channel scale s (B, C, 1).
# ---------------------------------------------------------------------------
def _rescale_kernel(s_ref, x_ref, o_ref):
    s = s_ref[...].astype(o_ref.dtype)          # (1, C, 1)
    o_ref[...] = x_ref[...] * s


# ---------------------------------------------------------------------------
# Wrapper
# ---------------------------------------------------------------------------
def attn_cnal(x_nchw, w1, b1, w2, b2, *, force_split=False):
    """SE-style channel attention.

    x_nchw: (B, C, H, W); w1: (C4, C), b1: (C4,), w2: (C, C4), b2: (C,)
    (PyTorch Linear convention: out = x @ W.T + b).
    """
    B, C, H, W = x_nchw.shape
    C4 = w1.shape[0]
    HW = H * W
    itemsize = jnp.dtype(x_nchw.dtype).itemsize

    pol = _vmem_policy()
    budget, limit_cap = pol["budget"], pol["limit_cap"]
    headroom, big_vmem = pol["headroom"], pol["big_vmem"]

    # No host-side pad: the block's last dim equals the full logical H*W, so
    # Mosaic masks the ragged tail (GAP mean divides by the true HW anyway).
    x_flat = x_nchw.reshape(B, C, HW)

    # Pre-transpose weights so kernels do plain x @ W.
    w1_t = jnp.transpose(w1)              # (C, C4)
    w2_t = jnp.transpose(w2)              # (C4, C)
    b1_2d = b1.reshape(1, C4)
    b2_2d = b2.reshape(1, C)
    weight_bytes = 4 * (C * C4 + C4 + C4 * C + C)

    # Per-block working-set accounting (bt = batch rows per grid step):
    # 3 input buffers + 2 output buffers of the x block, plus a full f32 block
    # as margin for compiler temporaries (reduction / broadcast scratch).
    x_row_bytes = C * HW * itemsize
    f32_row_bytes = C * HW * 4

    def _block_need(bt_):
        return bt_ * (5 * x_row_bytes + f32_row_bytes) + weight_bytes

    fused_fits = _block_need(1) <= budget

    if fused_fits and not force_split:
        # ---------------- fused single pass: 1 read + 1 write of x ----------
        # bt is sized by VMEM and grid-step count only; the MLP matmuls are
        # negligible FLOPs and fully hidden under the x DMA.
        bt = 1
        for cand in range(min(B, 8), 0, -1):
            if B % cand == 0 and _block_need(cand) <= budget:
                bt = cand
                break
        # Keep >= 2 grid steps when B >= 2 (software pipelining + both
        # TensorCores on v7x), >= 4 steps for larger batches.
        if B >= 2:
            bt = min(bt, B // 2)
        if B >= 8:
            bt = min(bt, B // 4)
        bt = max(bt, 1)
        while B % bt:
            bt -= 1
        grid_steps = B // bt

        need = _block_need(bt)
        vmem_limit = int(min(limit_cap, max(headroom * need, 16 * _MIB)))

        kernel = functools.partial(_attn_cnal_fused_kernel, inv_hw=1.0 / HW)

        # Constant-index weight/bias blocks: single-buffer (DMA'd once).
        def wspec(shape):
            return pl.BlockSpec(shape, lambda b: (0,) * len(shape),
                                pipeline_mode=pl.Buffered(1))

        # Triple-buffer the x input when the grid is long enough to benefit
        # (hides the long DMA; most helpful on bandwidth-starved v5e).
        if grid_steps >= 3:
            x_spec = pl.BlockSpec((bt, C, HW), lambda b: (b, 0, 0),
                                  pipeline_mode=pl.Buffered(3))
        else:
            x_spec = pl.BlockSpec((bt, C, HW), lambda b: (b, 0, 0))

        cost = pl.CostEstimate(
            flops=int(B * (2 * C * HW + 4 * C * C4)),
            transcendentals=int(B * C),
            bytes_accessed=int(2 * B * C * HW * itemsize + weight_bytes),
        )

        out_flat = pl.pallas_call(
            kernel,
            out_shape=jax.ShapeDtypeStruct((B, C, HW), x_nchw.dtype),
            grid_spec=pltpu.PrefetchScalarGridSpec(
                num_scalar_prefetch=0,
                grid=(grid_steps,),
                in_specs=[
                    x_spec,                                               # x
                    wspec((C, C4)),                                       # w1^T
                    wspec((1, C4)),                                       # b1
                    wspec((C4, C)),                                       # w2^T
                    wspec((1, C)),                                        # b2
                ],
                out_specs=pl.BlockSpec((bt, C, HW), lambda b: (b, 0, 0)),
            ),
            compiler_params=pltpu.CompilerParams(
                dimension_semantics=("parallel",),
                vmem_limit_bytes=vmem_limit,
            ),
            cost_estimate=cost,
        )(x_flat, w1_t, b1_2d, w2_t, b2_2d)
    else:
        # ---------------- split path (huge feature maps; VMEM-safe) ---------
        # (a) tiny GAP + MLP in plain XLA -> per-channel scale s.
        gap = jnp.mean(x_flat, axis=-1, dtype=jnp.float32)                    # (B, C)
        h = jnp.maximum(gap @ w1_t.astype(jnp.float32) + b1_2d, 0.0)
        s = jax.nn.sigmoid(h @ w2_t.astype(jnp.float32) + b2_2d)              # (B, C)
        s3 = s[:, :, None]                                                    # (B, C, 1)

        # (b) lane-dense elementwise rescale with a fixed large lane tile and
        #     a cdiv grid (masked last block) — never collapses to 128 lanes.
        target_block_bytes = (12 * _MIB) if big_vmem else (4 * _MIB)
        hw_tile = (target_block_bytes // (4 * C * itemsize)) // _LANE * _LANE
        hw_tile = max(_LANE, hw_tile)
        if hw_tile >= HW:
            hw_tile = HW                     # full dim -> always layout-legal
        n_hw = pl.cdiv(HW, hw_tile)

        need = 4 * C * hw_tile * itemsize + 4 * C * 4
        vmem_limit = int(min(limit_cap, max(headroom * need, 16 * _MIB)))

        cost = pl.CostEstimate(
            flops=int(B * C * HW),
            transcendentals=0,
            # Include the XLA-side GAP read of x (memory-bound op hint).
            bytes_accessed=int(3 * B * C * HW * itemsize),
        )

        out_flat = pl.pallas_call(
            _rescale_kernel,
            out_shape=jax.ShapeDtypeStruct((B, C, HW), x_nchw.dtype),
            grid_spec=pltpu.PrefetchScalarGridSpec(
                num_scalar_prefetch=0,
                grid=(B, n_hw),
                in_specs=[
                    pl.BlockSpec((1, C, 1), lambda b, t: (b, 0, 0)),           # s
                    pl.BlockSpec((1, C, hw_tile), lambda b, t: (b, 0, t)),     # x
                ],
                out_specs=pl.BlockSpec((1, C, hw_tile), lambda b, t: (b, 0, t)),
            ),
            compiler_params=pltpu.CompilerParams(
                dimension_semantics=("parallel", "parallel"),
                vmem_limit_bytes=vmem_limit,
            ),
            cost_estimate=cost,
        )(s3, x_flat)

    return out_flat.reshape(B, C, H, W)


# ---------------------------------------------------------------------------
# Params / reference
# ---------------------------------------------------------------------------
def init_params(key, c, dtype=jnp.float32):
    """Mirror the PyTorch module init: fc1 weight xavier_normal_, everything
    else default Linear init U(+-1/sqrt(fan_in))."""
    c4 = round(c / 4)
    k1, k2, k3, k4 = jax.random.split(key, 4)

    std1 = (2.0 / (c + c4)) ** 0.5
    w1 = (std1 * jax.random.normal(k1, (c4, c))).astype(dtype)
    bound1 = 1.0 / (c ** 0.5)
    b1 = jax.random.uniform(k4, (c4,), minval=-bound1, maxval=bound1).astype(dtype)

    bound2 = 1.0 / (c4 ** 0.5)
    w2 = jax.random.uniform(k2, (c, c4), minval=-bound2, maxval=bound2).astype(dtype)
    b2 = jax.random.uniform(k3, (c,), minval=-bound2, maxval=bound2).astype(dtype)
    return w1, b1, w2, b2


def _reference(x, w1, b1, w2, b2):
    gap = jnp.mean(x.astype(jnp.float32), axis=(2, 3))                       # (B, C)
    h = jnp.maximum(gap @ w1.T.astype(jnp.float32) + b1.astype(jnp.float32), 0.0)
    s = jax.nn.sigmoid(h @ w2.T.astype(jnp.float32) + b2.astype(jnp.float32))
    return s[:, :, None, None].astype(x.dtype) * x


if __name__ == "__main__":
    key = jax.random.PRNGKey(0)
    k1, k2, k3, k4, k5, k6, k7 = jax.random.split(key, 7)

    # --- Test 1: fused path, (B,C,H,W)=(2,4,16,16), f32, HW=256 aligned -----
    B, C, H, W = 2, 4, 16, 16
    x = jax.random.normal(k1, (B, C, H, W), dtype=jnp.float32)
    w1, b1, w2, b2 = init_params(k2, C)
    out = jax.block_until_ready(attn_cnal(x, w1, b1, w2, b2))
    ref = _reference(x, w1, b1, w2, b2)
    assert out.shape == (B, C, H, W)
    assert jnp.allclose(out, ref, atol=1e-5, rtol=1e-5)

    # --- Test 2: split (two-pass) fallback path on the same inputs ----------
    out_split = jax.block_until_ready(attn_cnal(x, w1, b1, w2, b2, force_split=True))
    assert jnp.allclose(out_split, ref, atol=1e-5, rtol=1e-5)

    # --- Test 3: ragged HW (7x7 -> masked lane tail, no host pad) -----------
    B2, C2, H2, W2 = 2, 8, 7, 7
    x2 = jax.random.normal(k3, (B2, C2, H2, W2), dtype=jnp.float32)
    p2 = init_params(k4, C2)
    out2 = jax.block_until_ready(attn_cnal(x2, *p2))
    ref2 = _reference(x2, *p2)
    assert out2.shape == (B2, C2, H2, W2)
    assert jnp.allclose(out2, ref2, atol=1e-5, rtol=1e-5)

    # --- Test 4: bf16 activations (no-f32-copy path) -------------------------
    x3 = jax.random.normal(k5, (2, 8, 16, 16), dtype=jnp.bfloat16)
    out3 = jax.block_until_ready(attn_cnal(x3, *p2))
    ref3 = _reference(x3, *p2)
    assert jnp.allclose(out3.astype(jnp.float32), ref3.astype(jnp.float32),
                        atol=5e-2, rtol=5e-2)

    # --- Test 5: multi-step grid (B=8 -> 4 grid steps, Buffered(3) x path) ---
    B4, C4_, H4, W4 = 8, 16, 8, 8
    x4 = jax.random.normal(k6, (B4, C4_, H4, W4), dtype=jnp.float32)
    p4 = init_params(k7, C4_)
    out4 = jax.block_until_ready(attn_cnal(x4, *p4))
    ref4 = _reference(x4, *p4)
    assert out4.shape == (B4, C4_, H4, W4)
    assert jnp.allclose(out4, ref4, atol=1e-5, rtol=1e-5)

    print("KERNEL_OK")
</pallas_src>

<mosaic_0001>
module attributes {stable_mosaic.version = 11 : i64} {
  func.func @_attn_cnal_fused_kernel(%arg0: i32, %arg1: memref<1x4x256xf32, #tpu.memory_space<vmem>>, %arg2: memref<4x1xf32, #tpu.memory_space<vmem>>, %arg3: memref<1x1xf32, #tpu.memory_space<vmem>>, %arg4: memref<1x4xf32, #tpu.memory_space<vmem>>, %arg5: memref<1x4xf32, #tpu.memory_space<vmem>>, %arg6: memref<1x4x256xf32, #tpu.memory_space<vmem>>) attributes {dimension_semantics = [#tpu.dimension_semantics<parallel>], iteration_bounds = array<i64: 2>, scalar_prefetch = 0 : i64, scratch_operands = 0 : i64, tpu.core_type = #tpu.core_type<tc>, window_params = [{transform_indices = @transform_0, window_bounds = array<i64: 1, 4, 256>}, {pipeline_mode = #tpu.pipeline_mode<synchronous>, transform_indices = @transform_1, window_bounds = array<i64: 4, 1>}, {pipeline_mode = #tpu.pipeline_mode<synchronous>, transform_indices = @transform_2, window_bounds = array<i64: 1, 1>}, {pipeline_mode = #tpu.pipeline_mode<synchronous>, transform_indices = @transform_3, window_bounds = array<i64: 1, 4>}, {pipeline_mode = #tpu.pipeline_mode<synchronous>, transform_indices = @transform_4, window_bounds = array<i64: 1, 4>}, {transform_indices = @transform_5, window_bounds = array<i64: 1, 4, 256>}]} {
    %c0 = arith.constant 0 : index
    %c0_0 = arith.constant 0 : index
    %c0_1 = arith.constant 0 : index
    %0 = vector.load %arg1[%c0, %c0_0, %c0_1] : memref<1x4x256xf32, #tpu.memory_space<vmem>>, vector<1x4x256xf32>
    %cst = arith.constant dense<0.000000e+00> : vector<1x4xf32>
    %1 = vector.multi_reduction <add>, %0, %cst [2] : vector<1x4x256xf32> to vector<1x4xf32>
    %cst_2 = arith.constant 3.906250e-03 : f32
    %2 = vector.broadcast %cst_2 : f32 to vector<1x4xf32>
    %3 = arith.mulf %1, %2 : vector<1x4xf32>
    %c0_3 = arith.constant 0 : index
    %c0_4 = arith.constant 0 : index
    %4 = vector.load %arg2[%c0_3, %c0_4] : memref<4x1xf32, #tpu.memory_space<vmem>>, vector<4x1xf32>
    %cst_5 = arith.constant dense<0.000000e+00> : vector<1x1xf32>
    %5 = tpu.matmul %3, %4, %cst_5 {dimension_numbers = #tpu.dot_dimension_numbers<[1], [0], [0], [1], [0, 0, 1, 1], [], []>} : vector<1x4xf32>, vector<4x1xf32>, vector<1x1xf32> -> vector<1x1xf32>
    %c0_6 = arith.constant 0 : index
    %c0_7 = arith.constant 0 : index
    %6 = vector.load %arg3[%c0_6, %c0_7] : memref<1x1xf32, #tpu.memory_space<vmem>>, vector<1x1xf32>
    %7 = arith.addf %5, %6 : vector<1x1xf32>
    %cst_8 = arith.constant 0.000000e+00 : f32
    %8 = vector.broadcast %cst_8 : f32 to vector<1x1xf32>
    %9 = arith.maximumf %7, %8 : vector<1x1xf32>
    %c0_9 = arith.constant 0 : index
    %c0_10 = arith.constant 0 : index
    %10 = vector.load %arg4[%c0_9, %c0_10] : memref<1x4xf32, #tpu.memory_space<vmem>>, vector<1x4xf32>
    %cst_11 = arith.constant dense<0.000000e+00> : vector<1x4xf32>
    %11 = tpu.matmul %9, %10, %cst_11 {dimension_numbers = #tpu.dot_dimension_numbers<[1], [0], [0], [1], [0, 0, 1, 1], [], []>} : vector<1x1xf32>, vector<1x4xf32>, vector<1x4xf32> -> vector<1x4xf32>
    %c0_12 = arith.constant 0 : index
    %c0_13 = arith.constant 0 : index
    %12 = vector.load %arg5[%c0_12, %c0_13] : memref<1x4xf32, #tpu.memory_space<vmem>>, vector<1x4xf32>
    %13 = arith.addf %11, %12 : vector<1x4xf32>
    %14 = arith.negf %13 : vector<1x4xf32>
    %15 = math.exp %14 : vector<1x4xf32>
    %cst_14 = arith.constant 1.000000e+00 : f32
    %16 = vector.broadcast %cst_14 : f32 to vector<1x4xf32>
    %17 = arith.addf %16, %15 : vector<1x4xf32>
    %18 = arith.divf %16, %17 : vector<1x4xf32>
    %c0_15 = arith.constant 0 : index
    %c0_16 = arith.constant 0 : index
    %c0_17 = arith.constant 0 : index
    %19 = vector.load %arg1[%c0_15, %c0_16, %c0_17] : memref<1x4x256xf32, #tpu.memory_space<vmem>>, vector<1x4x256xf32>
    %20 = vector.shape_cast %18 : vector<1x4xf32> to vector<1x4x1xf32>
    %21 = vector.broadcast %20 : vector<1x4x1xf32> to vector<1x4x256xf32>
    %22 = arith.mulf %19, %21 : vector<1x4x256xf32>
    %c0_18 = arith.constant 0 : index
    %c0_19 = arith.constant 0 : index
    %c0_20 = arith.constant 0 : index
    %23 = vector.load %arg6[%c0_18, %c0_19, %c0_20] : memref<1x4x256xf32, #tpu.memory_space<vmem>>, vector<1x4x256xf32>
    tpu.vector_store %arg6[%c0_18, %c0_19, %c0_20], %22 {strides = array<i32>} : memref<1x4x256xf32, #tpu.memory_space<vmem>>, vector<1x4x256xf32>,
    return
  }
  func.func @transform_0(%arg0: i32) -> (i32, i32, i32) {
    %c0_i32 = arith.constant 0 : i32
    %c0_i32_0 = arith.constant 0 : i32
    %c0_i32_1 = arith.constant 0 : i32
    return %arg0, %c0_i32, %c0_i32_0 : i32, i32, i32
  }
  func.func @transform_1(%arg0: i32) -> (i32, i32) {
    %c0_i32 = arith.constant 0 : i32
    %c0_i32_0 = arith.constant 0 : i32
    %c0_i32_1 = arith.constant 0 : i32
    return %c0_i32, %c0_i32_0 : i32, i32
  }
  func.func @transform_2(%arg0: i32) -> (i32, i32) {
    %c0_i32 = arith.constant 0 : i32
    %c0_i32_0 = arith.constant 0 : i32
    %c0_i32_1 = arith.constant 0 : i32
    return %c0_i32, %c0_i32_0 : i32, i32
  }
  func.func @transform_3(%arg0: i32) -> (i32, i32) {
    %c0_i32 = arith.constant 0 : i32
    %c0_i32_0 = arith.constant 0 : i32
    %c0_i32_1 = arith.constant 0 : i32
    return %c0_i32, %c0_i32_0 : i32, i32
  }
  func.func @transform_4(%arg0: i32) -> (i32, i32) {
    %c0_i32 = arith.constant 0 : i32
    %c0_i32_0 = arith.constant 0 : i32
    %c0_i32_1 = arith.constant 0 : i32
    return %c0_i32, %c0_i32_0 : i32, i32
  }
  func.func @transform_5(%arg0: i32) -> (i32, i32, i32) {
    %c0_i32 = arith.constant 0 : i32
    %c0_i32_0 = arith.constant 0 : i32
    %c0_i32_1 = arith.constant 0 : i32
    return %arg0, %c0_i32, %c0_i32_0 : i32, i32, i32
  }
}

</mosaic_0001>

<llo_original>
// kernel: tpu_custom_call.1
$region0: #{tpu_custom_call.1}
  #allocation0 [shape = 'u32[]', space=smem, size = 0x4, offset = 0x4, fixed_abs, tag = 'smem constant byte address 0x4 - core index']
  #allocation1 [shape = 'u32[72,128]{1,0:T(1,128)}', space=vmem, size = 0x9000, scoped, tag = 'internal scratch']
  #allocation2 [shape = 'f32[1,1]{1,0:T(1,128)S(1)}', space=vmem, size = 0x200, scoped, tag = 'scoped memory for tpu_custom_call.1']
  %s0 = inlined_call_operand.hbm [shape: f32[2,4,256], index: 0, kind: input, shape index: {}]
  %s1 = inlined_call_operand.vmem [shape: f32[4,1], index: 1, kind: input, shape index: {}]
  %s2 = inlined_call_operand.<no memory space> [shape: f32[1,1], index: 2, kind: input, shape index: {}]
  %s3 = inlined_call_operand.vmem [shape: f32[1,4], index: 3, kind: input, shape index: {}]
  %s4 = inlined_call_operand.vmem [shape: f32[1,4], index: 4, kind: input, shape index: {}]
  %s5 = inlined_call_operand.hbm [shape: f32[2,4,256], index: 5, kind: output, shape index: {}]
  %s6 = sld [smem:[#allocation0]]
  $region57: #{tpu_custom_call.1} parent=0
    _
  %s8 = ssub.s32 1, %s6
  %s9 = scalar_select 0, %s8, %s6
  %v10 = vstv %s2
  %11 = vst [vmem:[#allocation2] sm:$0x1] %v10
  $region1: #{tpu_custom_call.1} parent=0
    #allocation3 [shape = 'u8[8192]{0}', space=vmem, size = 0x2000, scoped, tag = 'input window, operand 0']
    #allocation4 [shape = 's32[2]{0}', space=sflag, size = 0x8, scoped, tag = 'scoped memory for tpu_custom_call.1']
    #allocation5 [shape = 's32[2]{0}', space=sflag, size = 0x8, scoped, tag = 'scoped memory for tpu_custom_call.1']
    #allocation6 [shape = 'u8[8192]{0}', space=vmem, size = 0x2000, scoped, tag = 'output window, operand 0']
    %12 = vsyncpa [#allocation4], 0
    %s13 = scalar_lea.sflag [#allocation4], 1
    %14 = vsyncpa %s13, 0
    %15 = vsyncpa [#allocation5], 0
    %s16 = scalar_lea.sflag [#allocation5], 1
    %17 = vsyncpa %s16, 0
    loop: start=0, step=1, limit=4
    $region2: #{tpu_custom_call.1} parent=1 // loop_pre_header
      _
    $region3: #{tpu_custom_call.1} parent=1 // loop_header
      %s19 = sphi 0, %s23
      %p20 = scmp.ge.s32.totalorder %s19, 4
      %s29 = sphi 0, %s31
      %s32 = sphi 0, %s29
      %s33 = sphi 0, %s32
      %s49 = sphi 0, %s33
      %s53 = sphi 0, %s53
      %s55 = sphi 0, %s53
      %s56 = sphi 0, %s55
      %s70 = sphi 0, %s56
      %s74 = sphi 0, %s74
      %s76 = sphi 0, %s74
      %s77 = sphi 0, %s76
      %s91 = sphi 0, %s77
      %s95 = sphi 0, %s95
      %s97 = sphi 0, %s95
      %s98 = sphi 0, %s97
      %s112 = sphi 0, %s98
      %s116 = sphi 0, %s116
      %s118 = sphi 0, %s116
      %s119 = sphi 0, %s118
      %s133 = sphi 0, %s119
      %s139 = sphi 0, %s141
      %s142 = sphi 0, %s139
      %s143 = sphi 0, %s142
      %s159 = sphi 0, %s143
    $region4: #{tpu_custom_call.1} parent=1 // loop_header_branch
      %22 = sbr.rel (%p20) target = $region8
    $region5: #{tpu_custom_call.1} parent=1 // loop_body
      %s24 = ssub.s32 %s19, 1
      %s25 = ssub.s32 %s19, 2
      %s26 = sadd.s32 %s19, 1
      %s27 = ssub.s32 %s19, %s26
      %p28 = scmp.eq.s32.totalorder %s27, 0
      %s30 = sadd.s32 %s29, 1
      %s31 = scalar_select %p28, %s29, %s30
      %p34 = pneg %p28
      %p35 = scmp.eq.s32.totalorder %s19, 1
      %p36 = por %p34, %p35
      %p37 = scmp.ne.s32.totalorder %s29, %s32
      %p38 = scmp.eq.s32.totalorder %s19, 0
      %p39 = por %p37, %p38
      %p40 = scmp.ne.s32.totalorder %s29, %s32
      %p41 = scmp.eq.s32.totalorder %s24, 1
      %p42 = por %p40, %p41
      %p43 = scmp.ne.s32.totalorder %s32, %s33
      %p44 = scmp.eq.s32.totalorder %s24, 0
      %p45 = por %p43, %p44
      %p46 = scmp.ne.s32.totalorder %s32, %s33
      %p47 = scmp.eq.s32.totalorder %s25, 1
      %p48 = por %p46, %p47
      %p50 = scmp.ne.s32.totalorder %s33, %s49
      %p51 = scmp.eq.s32.totalorder %s25, 0
      %p52 = por %p50, %p51
      %s54 = sadd.s32 %s53, 1
      %p57 = scmp.eq.s32.totalorder %s19, 1
      %p58 = scmp.ne.s32.totalorder %s53, %s55
      %p59 = scmp.eq.s32.totalorder %s19, 0
      %p60 = por %p58, %p59
      %p61 = scmp.ne.s32.totalorder %s53, %s55
      %p62 = scmp.eq.s32.totalorder %s24, 1
      %p63 = por %p61, %p62
      %p64 = scmp.ne.s32.totalorder %s55, %s56
      %p65 = scmp.eq.s32.totalorder %s24, 0
      %p66 = por %p64, %p65
      %p67 = scmp.ne.s32.totalorder %s55, %s56
      %p68 = scmp.eq.s32.totalorder %s25, 1
      %p69 = por %p67, %p68
      %p71 = scmp.ne.s32.totalorder %s56, %s70
      %p72 = scmp.eq.s32.totalorder %s25, 0
      %p73 = por %p71, %p72
      %s75 = sadd.s32 %s74, 1
      %p78 = scmp.eq.s32.totalorder %s19, 1
      %p79 = scmp.ne.s32.totalorder %s74, %s76
      %p80 = scmp.eq.s32.totalorder %s19, 0
      %p81 = por %p79, %p80
      %p82 = scmp.ne.s32.totalorder %s74, %s76
      %p83 = scmp.eq.s32.totalorder %s24, 1
      %p84 = por %p82, %p83
      %p85 = scmp.ne.s32.totalorder %s76, %s77
      %p86 = scmp.eq.s32.totalorder %s24, 0
      %p87 = por %p85, %p86
      %p88 = scmp.ne.s32.totalorder %s76, %s77
      %p89 = scmp.eq.s32.totalorder %s25, 1
      %p90 = por %p88, %p89
      %p92 = scmp.ne.s32.totalorder %s77, %s91
      %p93 = scmp.eq.s32.totalorder %s25, 0
      %p94 = por %p92, %p93
      %s96 = sadd.s32 %s95, 1
      %p99 = scmp.eq.s32.totalorder %s19, 1
      %p100 = scmp.ne.s32.totalorder %s95, %s97
      %p101 = scmp.eq.s32.totalorder %s19, 0
      %p102 = por %p100, %p101
      %p103 = scmp.ne.s32.totalorder %s95, %s97
      %p104 = scmp.eq.s32.totalorder %s24, 1
      %p105 = por %p103, %p104
      %p106 = scmp.ne.s32.totalorder %s97, %s98
      %p107 = scmp.eq.s32.totalorder %s24, 0
      %p108 = por %p106, %p107
      %p109 = scmp.ne.s32.totalorder %s97, %s98
      %p110 = scmp.eq.s32.totalorder %s25, 1
      %p111 = por %p109, %p110
      %p113 = scmp.ne.s32.totalorder %s98, %s112
      %p114 = scmp.eq.s32.totalorder %s25, 0
      %p115 = por %p113, %p114
      %s117 = sadd.s32 %s116, 1
      %p120 = scmp.eq.s32.totalorder %s19, 1
      %p121 = scmp.ne.s32.totalorder %s116, %s118
      %p122 = scmp.eq.s32.totalorder %s19, 0
      %p123 = por %p121, %p122
      %p124 = scmp.ne.s32.totalorder %s116, %s118
      %p125 = scmp.eq.s32.totalorder %s24, 1
      %p126 = por %p124, %p125
      %p127 = scmp.ne.s32.totalorder %s118, %s119
      %p128 = scmp.eq.s32.totalorder %s24, 0
      %p129 = por %p127, %p128
      %p130 = scmp.ne.s32.totalorder %s118, %s119
      %p131 = scmp.eq.s32.totalorder %s25, 1
      %p132 = por %p130, %p131
      %p134 = scmp.ne.s32.totalorder %s119, %s133
      %p135 = scmp.eq.s32.totalorder %s25, 0
      %p136 = por %p134, %p135
      %s137 = ssub.s32 %s19, %s26
      %p138 = scmp.eq.s32.totalorder %s137, 0
      %s140 = sadd.s32 %s139, 1
      %s141 = scalar_select %p138, %s139, %s140
      %p144 = pneg %p138
      %p145 = scmp.eq.s32.totalorder %s19, 1
      %p146 = por %p144, %p145
      %p147 = scmp.ne.s32.totalorder %s139, %s142
      %p148 = scmp.eq.s32.totalorder %s19, 0
      %p149 = por %p147, %p148
      %p150 = scmp.ne.s32.totalorder %s139, %s142
      %p151 = scmp.eq.s32.totalorder %s24, 1
      %p152 = por %p150, %p151
      %p153 = scmp.ne.s32.totalorder %s142, %s143
      %p154 = scmp.eq.s32.totalorder %s24, 0
      %p155 = por %p153, %p154
      %p156 = scmp.ne.s32.totalorder %s142, %s143
      %p157 = scmp.eq.s32.totalorder %s25, 1
      %p158 = por %p156, %p157
      %p160 = scmp.ne.s32.totalorder %s143, %s159
      %p161 = scmp.eq.s32.totalorder %s25, 0
      %p162 = por %p160, %p161
      %p163 = scmp.le.s32.totalorder 1, %s19
      %p164 = scmp.lt.s32.totalorder %s19, 3
      %p165 = pnand %p163, %p164
      %p166 = pneg %p165
      // Predicated region
      $region9: #{tpu_custom_call.1} parent=5 // pred_check
        _
      $region10: #{tpu_custom_call.1} parent=5 // pred_check_branch
        %168 = sbr.rel (%p165) target = $region12
      $region11: #{tpu_custom_call.1} parent=5 // pred_region
        %s169 = ssub.s32 %s19, 1
        // Predicated region
        $region13: #{tpu_custom_call.1} parent=11 // pred_check
          %p170 = pneg %p66
        $region14: #{tpu_custom_call.1} parent=11 // pred_check_branch
          %172 = sbr.rel (%p170) target = $region16
        $region15: #{tpu_custom_call.1} parent=11 // pred_region
          _
        $region16: #{tpu_custom_call.1} parent=11 // pred_fallthru
          _
        // Predicated region
        $region17: #{tpu_custom_call.1} parent=11 // pred_check
          %p173 = pneg %p87
        $region18: #{tpu_custom_call.1} parent=11 // pred_check_branch
          %175 = sbr.rel (%p173) target = $region20
        $region19: #{tpu_custom_call.1} parent=11 // pred_region
          _
        $region20: #{tpu_custom_call.1} parent=11 // pred_fallthru
          _
        // Predicated region
        $region21: #{tpu_custom_call.1} parent=11 // pred_check
          %p176 = pneg %p108
        $region22: #{tpu_custom_call.1} parent=11 // pred_check_branch
          %178 = sbr.rel (%p176) target = $region24
        $region23: #{tpu_custom_call.1} parent=11 // pred_region
          _
        $region24: #{tpu_custom_call.1} parent=11 // pred_fallthru
          _
        // Predicated region
        $region25: #{tpu_custom_call.1} parent=11 // pred_check
          %p179 = pneg %p129
        $region26: #{tpu_custom_call.1} parent=11 // pred_check_branch
          %181 = sbr.rel (%p179) target = $region28
        $region27: #{tpu_custom_call.1} parent=11 // pred_region
          _
        $region28: #{tpu_custom_call.1} parent=11 // pred_fallthru
          _
      $region12: #{tpu_custom_call.1} parent=5 // pred_fallthru
        _
      %p182 = scmp.lt.s32.totalorder %s19, 2
      // Predicated region
      $region29: #{tpu_custom_call.1} parent=5 // pred_check
        %p183 = pneg %p182
      $region30: #{tpu_custom_call.1} parent=5 // pred_check_branch
        %185 = sbr.rel (%p183) target = $region32
      $region31: #{tpu_custom_call.1} parent=5 // pred_region
        // Predicated region
        $region33: #{tpu_custom_call.1} parent=31 // pred_check
          %p186 = pneg %p39
        $region34: #{tpu_custom_call.1} parent=31 // pred_check_branch
          %188 = sbr.rel (%p186) target = $region36
        $region35: #{tpu_custom_call.1} parent=31 // pred_region
          %s189 = sand.u32 %s29, 1
          %s190 = scalar_lea.sflag [#allocation4], %s189
          %s191 = sand.u32 %s29, 1
          %s192 = smul.addr %s191, 8
          %s193 = scalar_lea.vmem [#allocation3], %s192
          %195 = vsyncadd %s190, 0
          %s196 = smul.addr %s19, 2
          %s197 = smul.addr %s196, 4
          %s198 = scalar_lea.hbm %s0, %s197
          %s200 = sshll.u32 %s198, 4
          %s201 = int_to_ptr.hbm [resolvable:$true] %s200
          %s202 = sshll.u32 %s193, 4
          %s203 = int_to_ptr.vmem [resolvable:$true] %s202
          %205 = dma.hbm_to_vmem [thread:$0]  %s201, 128, %s203, %s190
        $region36: #{tpu_custom_call.1} parent=31 // pred_fallthru
          _
      $region32: #{tpu_custom_call.1} parent=5 // pred_fallthru
        _
      %p206 = scmp.le.s32.totalorder 1, %s19
      %p207 = scmp.lt.s32.totalorder %s19, 3
      %p208 = pnand %p206, %p207
      %p209 = pneg %p208
      // Predicated region
      $region37: #{tpu_custom_call.1} parent=5 // pred_check
        _
      $region38: #{tpu_custom_call.1} parent=5 // pred_check_branch
        %211 = sbr.rel (%p208) target = $region40
      $region39: #{tpu_custom_call.1} parent=5 // pred_region
        %s212 = ssub.s32 %s19, 1
        %s213 = sand.u32 %s32, 1
        %s214 = scalar_lea.sflag [#allocation4], %s213
        %s215 = sand.u32 %s32, 1
        %s216 = smul.addr %s215, 8
        %s217 = scalar_lea.vmem [#allocation3], %s216
        // Predicated region
        $region41: #{tpu_custom_call.1} parent=39 // pred_check
          %p218 = pneg %p45
        $region42: #{tpu_custom_call.1} parent=39 // pred_check_branch
          %220 = sbr.rel (%p218) target = $region44
        $region43: #{tpu_custom_call.1} parent=39 // pred_region
          %222 = dma.done %s214, 128
        $region44: #{tpu_custom_call.1} parent=39 // pred_fallthru
          _
        %s223 = sand.u32 %s32, 1
        %s224 = scalar_lea.sflag [#allocation4], %s223
        %s225 = sand.u32 %s32, 1
        %s226 = smul.addr %s225, 8
        %s227 = scalar_lea.vmem [#allocation3], %s226
        %p228 = pneg %p45
        %p229 = pneg %p42
        %p230 = pneg %p66
        %p231 = pneg %p63
        %p232 = pneg %p87
        %p233 = pneg %p84
        %p234 = pneg %p108
        %p235 = pneg %p105
        %p236 = pneg %p129
        %p237 = pneg %p126
        %p238 = pneg %p155
        %p239 = pneg %p152
        %s240 = sand.u32 %s142, 1
        %s241 = scalar_lea.sflag [#allocation5], %s240
        %s242 = sand.u32 %s142, 1
        %s243 = smul.addr %s242, 8
        %s244 = scalar_lea.vmem [#allocation6], %s243
        %v245 = vld [vmem:[%s217] sm:$0xff]
        %247 = vst [vmem:[#allocation1] ss:$2 sm:$0xff] %v245
        %v248 = vld.sshfl [vmem:[#allocation1] sm:$0xff pattern:$0x75316420]
        %v249 = vld.sshfl [vmem:[#allocation1 + $0x8] sm:$0xff pattern:$0x75316420]
        %vm252 = vcmask 1043456
        %v253 = vsel %vm252, %v248, 0.0
        %v254 = vsel %vm252, %v249, 0.0
        %v255 = vadd.f32 %v253, %v254
        %256 = vadd.xlane.f32.xlu0 %v255
        %v257 = vpop.xlane.xlu0 %256
        %v258 = vmul.f32 %v257, 0.00390625
        %v259 = vld [vmem:[%s1] sm:$0xf]
        %v260 = vld [vmem:[#allocation2] sm:$0x1]
        %v262 = vlaneseq
        %v263 = vand.u32 %v262, 127
        %v264 = vperm.slane %v258, %v263
        %vm265 = vcmask 31744
        %v266 = vsel %vm265, %v264, 0
        %v269 = vsel %vm252, %v259, 0
        %271 = vmatpush.msra.mxu0 0.0
        %272 = vmatpush.msra.mxu0 0.0
        %273 = vmatpush.msra.mxu0 0.0
        %274 = vmatpush.msra.mxu0 0.0
        %275 = vmatpush.msra.mxu0 0.0
        %276 = vmatpush.msra.mxu0 0.0
        %277 = vmatpush.msra.mxu0 0.0
        %278 = vmatpush.msra.mxu0 0.0
        %279 = vmatpush.msra.mxu0 0.0
        %280 = vmatpush.msra.mxu0 0.0
        %281 = vmatpush.msra.mxu0 0.0
        %282 = vmatpush.msra.mxu0 0.0
        %283 = vmatpush.msra.mxu0 0.0
        %284 = vmatpush.msra.mxu0 0.0
        %285 = vmatpush.msra.mxu0 0.0
        %286 = vmatpush.msra.mxu0 %v269
        %287 = vmatmul.f32.gmra.mxu0 %v266
        %v288 = vpop.f32.mrf.mxu0
        %v289 = vadd.f32 %v260, %v288
        %290 = vdwg.mxu0
        %v291 = vmax.f32 %v289, 0.0
        %v292 = vld [vmem:[%s3] sm:$0x1]
        %v293 = vld [vmem:[%s4] sm:$0x1]
        %vm294 = vcmask 7168
        %v296 = vsel %vm294, %v291, 0
        %vm298 = vcmask 1040384
        %v300 = vsel %vm298, %v292, 0
        %302 = vmatpush.msra.mxu0 0.0
        %303 = vmatpush.msra.mxu0 0.0
        %304 = vmatpush.msra.mxu0 0.0
        %305 = vmatpush.msra.mxu0 0.0
        %306 = vmatpush.msra.mxu0 0.0
        %307 = vmatpush.msra.mxu0 0.0
        %308 = vmatpush.msra.mxu0 0.0
        %309 = vmatpush.msra.mxu0 0.0
        %310 = vmatpush.msra.mxu0 0.0
        %311 = vmatpush.msra.mxu0 0.0
        %312 = vmatpush.msra.mxu0 0.0
        %313 = vmatpush.msra.mxu0 0.0
        %314 = vmatpush.msra.mxu0 0.0
        %315 = vmatpush.msra.mxu0 0.0
        %316 = vmatpush.msra.mxu0 0.0
        %317 = vmatpush.msra.mxu0 %v300
        %318 = vmatmul.f32.gmra.mxu0 %v296
        %v319 = vpop.f32.mrf.mxu0
        %v320 = vadd.f32 %v293, %v319
        %321 = vdwg.mxu0
        %v322 = vxor.u32 %v320, 2147483648
        %v323 = vmul.f32 %v322, 1.442695
        %v324 = vpow.pop %v323
        %v325 = vadd.f32 %v324, 1.0
        %v326 = vrcp.pop %v325
        %v327 = vmul.f32 %v325, %v326
        %v328 = vsub.f32 1.0, %v327
        %v329 = vmul.f32 %v326, %v328
        %v330 = vadd.f32 %v326, %v329
        %vm331 = vweird.f32 %v325
        %vm332 = vweird.f32 %v326
        %vm333 = vmor %vm331, %vm332
        %v334 = vsel %vm333, %v326, %v330
        %v335 = vand.u32 2147483647, %v325
        %vm336 = vcmp.eq.f32.partialorder %v335, 8.507059e+37
        %v337 = vand.u32 %v325, 2147483648
        %v338 = vor.u32 1.1754944e-38, %v337
        %v339 = vsel %vm336, %v338, %v334
        %v340 = vmul.f32 1.0, %v339
        %v341 = vperm.slane %v340, 0
        %v342 = vlaneseq
        %v343 = vshrl.u32 %v342, 7
        %345 = vset.pattern.permute.xlu0 %v343
        %346 = vperm.xlu0 %345, %v341
        %v347 = vpop.permute.xlu0 %346
        %v350 = vunpack.c.l.s4 839922192
        %v351 = vunpack.c.0.s8 %v350
        %v352 = vperm.slane %v347, %v351
        %v354 = vmul.f32 %v245, %v352
        %355 = vst [vmem:[%s244] sm:$0xff] %v354
        %s356 = sand.u32 %s142, 1
        %s357 = scalar_lea.sflag [#allocation5], %s356
        %s358 = sand.u32 %s142, 1
        %s359 = smul.addr %s358, 8
        %s360 = scalar_lea.vmem [#allocation6], %s359
        // Predicated region
        $region45: #{tpu_custom_call.1} parent=39 // pred_check
          %p361 = pneg %p152
        $region46: #{tpu_custom_call.1} parent=39 // pred_check_branch
          %363 = sbr.rel (%p361) target = $region48
        $region47: #{tpu_custom_call.1} parent=39 // pred_region
          %365 = vsyncadd %s357, 0
          %s366 = smul.addr %s24, 2
          %s367 = smul.addr %s366, 4
          %s368 = scalar_lea.hbm %s5, %s367
          %s370 = sshll.u32 %s360, 4
          %s371 = int_to_ptr.vmem [resolvable:$true] %s370
          %s372 = sshll.u32 %s368, 4
          %s373 = int_to_ptr.hbm [resolvable:$true] %s372
          %375 = dma.vmem_to_hbm [thread:$0]  %s371, 128, %s373, %s357
        $region48: #{tpu_custom_call.1} parent=39 // pred_fallthru
          _
      $region40: #{tpu_custom_call.1} parent=5 // pred_fallthru
        _
      %p376 = scmp.le.s32.totalorder 2, %s19
      // Predicated region
      $region49: #{tpu_custom_call.1} parent=5 // pred_check
        %p377 = pneg %p376
      $region50: #{tpu_custom_call.1} parent=5 // pred_check_branch
        %379 = sbr.rel (%p377) target = $region52
      $region51: #{tpu_custom_call.1} parent=5 // pred_region
        %s380 = ssub.s32 %s19, 2
        // Predicated region
        $region53: #{tpu_custom_call.1} parent=51 // pred_check
          %p381 = pneg %p158
        $region54: #{tpu_custom_call.1} parent=51 // pred_check_branch
          %383 = sbr.rel (%p381) target = $region56
        $region55: #{tpu_custom_call.1} parent=51 // pred_region
          %s384 = sand.u32 %s143, 1
          %s385 = scalar_lea.sflag [#allocation5], %s384
          %s386 = sand.u32 %s143, 1
          %s387 = smul.addr %s386, 8
          %s388 = scalar_lea.vmem [#allocation6], %s387
          %390 = dma.done %s385, 128
        $region56: #{tpu_custom_call.1} parent=51 // pred_fallthru
          _
      $region52: #{tpu_custom_call.1} parent=5 // pred_fallthru
        _
    $region6: #{tpu_custom_call.1} parent=1 // loop_footer
      %s23 = sadd.s32 1, %s19
    $region7: #{tpu_custom_call.1} parent=1 // loop_footer_branch
      %18 = sbr.rel target = $region3
    $region8: #{tpu_custom_call.1} parent=1 // loop_exit
      _
    %391 = vsyncpa [#allocation4], 1
    %s392 = scalar_lea.sflag [#allocation4], 1
    %393 = vsyncpa %s392, 1
    %394 = vsyncpa [#allocation5], 1
    %s395 = scalar_lea.sflag [#allocation5], 1
    %396 = vsyncpa %s395, 1

</llo_original>
